<compile_context>
chip_gen: v7x
topology: tpu7x:2x2x1
jax: 0.10.0
libtpu: 0.0.40
codegen_flags: <defaults>
</compile_context>

<pallas_src>
import functools

import jax
import jax.numpy as jnp
from jax import lax
from jax.experimental import pallas as pl
from jax.experimental.pallas import tpu as pltpu

LANE = 128  # TPU lane width; head dim is padded to a multiple of this.


def _self_attention_kernel(x_ref, w_ref, b_ref, o_ref, *, scale, hp):
    """One batch element per grid step.

    x_ref: (1, T, C)   bf16
    w_ref: (C, 3*hp)   bf16   fused [Wq | Wk | Wv], zero-padded H -> hp
    b_ref: (1, 3*hp)   f32    fused [bq | bk | bv], zero-padded
    o_ref: (1, T, hp)  f32    lane-dense padded output (caller slices [:, :, :H])
    """
    x = x_ref[0]                                            # (T, C) bf16

    # Fused QKV projection: single MXU pass, bf16 operands, f32 accumulation.
    qkv = jnp.dot(x, w_ref[...], preferred_element_type=jnp.float32) + b_ref[...]

    # Fold 1/sqrt(head_size) into q (bias scaled too) — algebraically identical
    # to `q @ k^T * head_size**-0.5` from the original module.
    q = qkv[:, 0 * hp:1 * hp] * scale                       # (T, hp) f32
    k = qkv[:, 1 * hp:2 * hp]                               # (T, hp) f32
    v = qkv[:, 2 * hp:3 * hp]                               # (T, hp) f32

    # scores = q @ k^T: contract last dims directly, no materialized transpose.
    scores = lax.dot_general(q, k, (((1,), (1,)), ((), ())),
                             preferred_element_type=jnp.float32)   # (T, T)

    # Causal (lower-triangular) mask == torch.tril(ones(T, T)).
    T = scores.shape[0]
    row = lax.broadcasted_iota(jnp.int32, (T, T), 0)
    col = lax.broadcasted_iota(jnp.int32, (T, T), 1)
    scores = jnp.where(col <= row, scores, -jnp.inf)

    # Numerically-stable softmax along the last axis (f32 VPU/EUP work).
    m = jnp.max(scores, axis=-1, keepdims=True)
    p = jnp.exp(scores - m)
    denom = jnp.sum(p, axis=-1, keepdims=True)
    w = p * pl.reciprocal(denom, approx=True)

    # TODO(synk): nn.Dropout on attention weights omitted (eval-mode / identity).

    # Attention-weighted values: bf16 MXU operands, f32 accumulation.
    out = jnp.dot(w.astype(jnp.bfloat16), v.astype(jnp.bfloat16),
                  preferred_element_type=jnp.float32)       # (T, hp)
    o_ref[0] = out.astype(o_ref.dtype)


def self_attention(x, wq, bq, wk, bk, wv, bv, *, head_size):
    """x: (B, T, C); weights (C, H); biases (H,). Returns (B, T, H) in x.dtype."""
    B, T, C = x.shape
    H = wq.shape[1]
    hp = max(((H + LANE - 1) // LANE) * LANE, LANE)  # lane-dense padded head size

    # Fuse + zero-pad the three projections into one weight/bias.
    def pad_w(w):
        return jnp.pad(w, ((0, 0), (0, hp - H)))

    def pad_b(b):
        return jnp.pad(b, (0, hp - H))

    w_qkv = jnp.concatenate([pad_w(wq), pad_w(wk), pad_w(wv)], axis=1)  # (C, 3*hp)
    b_qkv = jnp.concatenate([pad_b(bq), pad_b(bk), pad_b(bv)]).reshape(1, 3 * hp)

    # bf16 MXU operands (halves input/weight DMA bytes); accumulation stays f32.
    x_b = x.astype(jnp.bfloat16)
    w_b = w_qkv.astype(jnp.bfloat16)
    b_f = b_qkv.astype(jnp.float32)

    kernel = functools.partial(_self_attention_kernel,
                               scale=float(head_size) ** -0.5, hp=hp)

    flops = B * (2 * T * C * 3 * hp     # fused QKV projection
                 + 2 * T * T * hp       # q @ k^T
                 + 2 * T * T * hp)      # p @ v
    bytes_accessed = (x_b.size * 2 + w_b.size * 2 + b_f.size * 4
                      + B * T * hp * 4)
    cost = pl.CostEstimate(flops=flops, transcendentals=B * T * T,
                           bytes_accessed=bytes_accessed)

    out_padded = pl.pallas_call(
        kernel,
        out_shape=jax.ShapeDtypeStruct((B, T, hp), jnp.float32),
        grid_spec=pltpu.PrefetchScalarGridSpec(
            num_scalar_prefetch=0,
            grid=(B,),
            in_specs=[
                pl.BlockSpec((1, T, C), lambda b: (b, 0, 0)),      # x
                pl.BlockSpec((C, 3 * hp), lambda b: (0, 0)),       # fused Wqkv
                pl.BlockSpec((1, 3 * hp), lambda b: (0, 0)),       # fused bias
            ],
            out_specs=pl.BlockSpec((1, T, hp), lambda b: (b, 0, 0)),
        ),
        compiler_params=pltpu.CompilerParams(
            # Batch axis shards across v7x's two TensorCores; harmless on v5e/v6e.
            dimension_semantics=("parallel",)),
        cost_estimate=cost,
    )(x_b, w_b, b_f)

    # Drop the lane padding; kernel-side stores stayed lane-dense.
    return out_padded[:, :, :H].astype(x.dtype)


def reference_self_attention(x, wq, bq, wk, bk, wv, bv, head_size):
    """Pure-f32 reference matching the PyTorch module semantics (eval mode)."""
    q = x @ wq + bq
    k = x @ wk + bk
    v = x @ wv + bv
    scores = jnp.einsum("btd,bsd->bts", q, k) * (head_size ** -0.5)
    T = x.shape[1]
    mask = jnp.tril(jnp.ones((T, T), dtype=bool))
    scores = jnp.where(mask, scores, -jnp.inf)
    w = jax.nn.softmax(scores, axis=-1)
    return jnp.einsum("bts,bsh->bth", w, v)


def reference_self_attention_bf16(x, wq, bq, wk, bk, wv, bv, head_size):
    """Reference mirroring the kernel's bf16-MXU / f32-accumulate precision."""
    xb = x.astype(jnp.bfloat16)

    def proj(w, b):
        return jnp.dot(xb, w.astype(jnp.bfloat16),
                       preferred_element_type=jnp.float32) + b

    q = proj(wq, bq) * (head_size ** -0.5)
    k = proj(wk, bk)
    v = proj(wv, bv)
    scores = jnp.einsum("btd,bsd->bts", q, k, preferred_element_type=jnp.float32)
    T = x.shape[1]
    mask = jnp.tril(jnp.ones((T, T), dtype=bool))
    scores = jnp.where(mask, scores, -jnp.inf)
    w = jax.nn.softmax(scores, axis=-1)
    return jnp.einsum("bts,bsh->bth", w.astype(jnp.bfloat16),
                      v.astype(jnp.bfloat16),
                      preferred_element_type=jnp.float32)


if __name__ == "__main__":
    # Shapes implied by the module: n_embed=32, head_size=16, block_size (T)=8, batch=2.
    B, T, C, H = 2, 8, 32, 16

    key = jax.random.PRNGKey(0)
    kx, kwq, kbq, kwk, kbk, kwv, kbv = jax.random.split(key, 7)

    x = jax.random.normal(kx, (B, T, C), dtype=jnp.float32)
    wq = jax.random.normal(kwq, (C, H), dtype=jnp.float32) * (C ** -0.5)
    bq = jax.random.normal(kbq, (H,), dtype=jnp.float32) * 0.01
    wk = jax.random.normal(kwk, (C, H), dtype=jnp.float32) * (C ** -0.5)
    bk = jax.random.normal(kbk, (H,), dtype=jnp.float32) * 0.01
    wv = jax.random.normal(kwv, (C, H), dtype=jnp.float32) * (C ** -0.5)
    bv = jax.random.normal(kbv, (H,), dtype=jnp.float32) * 0.01

    out = self_attention(x, wq, bq, wk, bk, wv, bv, head_size=H)
    out = jax.block_until_ready(out)
    assert out.shape == (B, T, H)

    ref_matched = reference_self_attention_bf16(x, wq, bq, wk, bk, wv, bv, H)
    ref_f32 = reference_self_attention(x, wq, bq, wk, bk, wv, bv, H)

    # Tight check against a precision-matched (bf16-MXU) reference: validates
    # the fused/padded kernel logic itself.
    assert jnp.allclose(out, ref_matched, atol=5e-3, rtol=5e-3), \
        "mismatch vs bf16-matched reference"
    # Looser check against exact f32 module semantics (bf16 MXU operand rounding).
    assert jnp.allclose(out, ref_f32, atol=5e-2, rtol=5e-2), \
        "mismatch vs f32 reference"

    print("KERNEL_OK")
</pallas_src>

<mosaic_0001>
module attributes {stable_mosaic.version = 11 : i64} {
  func.func @_self_attention_kernel(%arg0: i32, %arg1: memref<1x8x32xbf16, #tpu.memory_space<vmem>>, %arg2: memref<32x384xbf16, #tpu.memory_space<vmem>>, %arg3: memref<1x384xf32, #tpu.memory_space<vmem>>, %arg4: memref<1x8x128xf32, #tpu.memory_space<vmem>>) attributes {dimension_semantics = [#tpu.dimension_semantics<parallel>], iteration_bounds = array<i64: 2>, scalar_prefetch = 0 : i64, scratch_operands = 0 : i64, tpu.core_type = #tpu.core_type<tc>, window_params = [{transform_indices = @transform_0, window_bounds = array<i64: 1, 8, 32>}, {pipeline_mode = #tpu.pipeline_mode<synchronous>, transform_indices = @transform_1, window_bounds = array<i64: 32, 384>}, {pipeline_mode = #tpu.pipeline_mode<synchronous>, transform_indices = @transform_2, window_bounds = array<i64: 1, 384>}, {transform_indices = @transform_3, window_bounds = array<i64: 1, 8, 128>}]} {
    %c0 = arith.constant 0 : index
    %c0_0 = arith.constant 0 : index
    %c0_1 = arith.constant 0 : index
    %0 = vector.load %arg1[%c0, %c0_0, %c0_1] : memref<1x8x32xbf16, #tpu.memory_space<vmem>>, vector<1x8x32xbf16>
    %1 = vector.shape_cast %0 : vector<1x8x32xbf16> to vector<8x32xbf16>
    %c0_2 = arith.constant 0 : index
    %c0_3 = arith.constant 0 : index
    %2 = vector.load %arg2[%c0_2, %c0_3] : memref<32x384xbf16, #tpu.memory_space<vmem>>, vector<32x384xbf16>
    %cst = arith.constant dense<0.000000e+00> : vector<8x384xf32>
    %3 = tpu.matmul %1, %2, %cst {dimension_numbers = #tpu.dot_dimension_numbers<[1], [0], [0], [1], [0, 0, 1, 1], [], []>} : vector<8x32xbf16>, vector<32x384xbf16>, vector<8x384xf32> -> vector<8x384xf32>
    %c0_4 = arith.constant 0 : index
    %c0_5 = arith.constant 0 : index
    %4 = vector.load %arg3[%c0_4, %c0_5] : memref<1x384xf32, #tpu.memory_space<vmem>>, vector<1x384xf32>
    %5 = vector.broadcast %4 : vector<1x384xf32> to vector<8x384xf32>
    %6 = arith.addf %3, %5 : vector<8x384xf32>
    %7 = vector.extract_strided_slice %6 {offsets = [0, 0], sizes = [8, 128], strides = [1, 1]} : vector<8x384xf32> to vector<8x128xf32>
    %cst_6 = arith.constant 2.500000e-01 : f32
    %8 = vector.broadcast %cst_6 : f32 to vector<8x128xf32>
    %9 = arith.mulf %7, %8 : vector<8x128xf32>
    %10 = vector.extract_strided_slice %6 {offsets = [0, 128], sizes = [8, 128], strides = [1, 1]} : vector<8x384xf32> to vector<8x128xf32>
    %11 = vector.extract_strided_slice %6 {offsets = [0, 256], sizes = [8, 128], strides = [1, 1]} : vector<8x384xf32> to vector<8x128xf32>
    %cst_7 = arith.constant dense<0.000000e+00> : vector<8x8xf32>
    %12 = tpu.matmul %9, %10, %cst_7 {dimension_numbers = #tpu.dot_dimension_numbers<[1], [1], [0], [0], [0, 0, 1, 0], [], []>} : vector<8x128xf32>, vector<8x128xf32>, vector<8x8xf32> -> vector<8x8xf32>
    %13 = tpu.iota {dimensions = array<i32: 0>} : vector<8x8xi32>
    %14 = tpu.iota {dimensions = array<i32: 1>} : vector<8x8xi32>
    %15 = arith.cmpi sle, %14, %13 : vector<8x8xi32>
    %cst_8 = arith.constant 0xFF800000 : f32
    %16 = vector.broadcast %cst_8 : f32 to vector<8x8xf32>
    %17 = arith.select %15, %12, %16 : vector<8x8xi1>, vector<8x8xf32>
    %cst_9 = arith.constant dense<0xFF800000> : vector<8xf32>
    %18 = vector.multi_reduction <maximumf>, %17, %cst_9 [1] : vector<8x8xf32> to vector<8xf32>
    %19 = vector.shape_cast %18 : vector<8xf32> to vector<8x1xf32>
    %20 = vector.broadcast %19 : vector<8x1xf32> to vector<8x8xf32>
    %21 = arith.subf %17, %20 : vector<8x8xf32>
    %22 = math.exp %21 : vector<8x8xf32>
    %cst_10 = arith.constant dense<0.000000e+00> : vector<8xf32>
    %23 = vector.multi_reduction <add>, %22, %cst_10 [1] : vector<8x8xf32> to vector<8xf32>
    %24 = vector.shape_cast %23 : vector<8xf32> to vector<8x1xf32>
    %25 = tpu.reciprocal %24 {approx = true} : vector<8x1xf32> -> vector<8x1xf32>
    %26 = vector.broadcast %25 : vector<8x1xf32> to vector<8x8xf32>
    %27 = arith.mulf %22, %26 : vector<8x8xf32>
    %28 = arith.truncf %27 : vector<8x8xf32> to vector<8x8xbf16>
    %29 = arith.truncf %11 : vector<8x128xf32> to vector<8x128xbf16>
    %cst_11 = arith.constant dense<0.000000e+00> : vector<8x128xf32>
    %30 = tpu.matmul %28, %29, %cst_11 {dimension_numbers = #tpu.dot_dimension_numbers<[1], [0], [0], [1], [0, 0, 1, 1], [], []>} : vector<8x8xbf16>, vector<8x128xbf16>, vector<8x128xf32> -> vector<8x128xf32>
    %c0_12 = arith.constant 0 : index
    %c0_13 = arith.constant 0 : index
    %c0_14 = arith.constant 0 : index
    %31 = vector.load %arg4[%c0_12, %c0_13, %c0_14] : memref<1x8x128xf32, #tpu.memory_space<vmem>>, vector<1x8x128xf32>
    %32 = vector.shape_cast %31 : vector<1x8x128xf32> to vector<8x128xf32>
    %33 = vector.shape_cast %30 : vector<8x128xf32> to vector<1x8x128xf32>
    tpu.vector_store %arg4[%c0_12, %c0_13, %c0_14], %33 {strides = array<i32>} : memref<1x8x128xf32, #tpu.memory_space<vmem>>, vector<1x8x128xf32>,
    return
  }
  func.func @transform_0(%arg0: i32) -> (i32, i32, i32) {
    %c0_i32 = arith.constant 0 : i32
    %c0_i32_0 = arith.constant 0 : i32
    %c0_i32_1 = arith.constant 0 : i32
    return %arg0, %c0_i32, %c0_i32_0 : i32, i32, i32
  }
  func.func @transform_1(%arg0: i32) -> (i32, i32) {
    %c0_i32 = arith.constant 0 : i32
    %c0_i32_0 = arith.constant 0 : i32
    %c0_i32_1 = arith.constant 0 : i32
    return %c0_i32, %c0_i32_0 : i32, i32
  }
  func.func @transform_2(%arg0: i32) -> (i32, i32) {
    %c0_i32 = arith.constant 0 : i32
    %c0_i32_0 = arith.constant 0 : i32
    %c0_i32_1 = arith.constant 0 : i32
    return %c0_i32, %c0_i32_0 : i32, i32
  }
  func.func @transform_3(%arg0: i32) -> (i32, i32, i32) {
    %c0_i32 = arith.constant 0 : i32
    %c0_i32_0 = arith.constant 0 : i32
    %c0_i32_1 = arith.constant 0 : i32
    return %arg0, %c0_i32, %c0_i32_0 : i32, i32, i32
  }
}

</mosaic_0001>

<llo_original>
// kernel: tpu_custom_call.1
$region0: #{tpu_custom_call.1}
  #allocation0 [shape = 'u32[]', space=smem, size = 0x4, offset = 0x4, fixed_abs, tag = 'smem constant byte address 0x4 - core index']
  #allocation1 [shape = 'u32[144,128]{1,0:T(1,128)}', space=vmem, size = 0x12000, scoped, tag = 'internal scratch']
  %s0 = inlined_call_operand.hbm [shape: bf16[2,8,32], index: 0, kind: input, shape index: {}]
  %s1 = inlined_call_operand.hbm [shape: bf16[32,384], index: 1, kind: input, shape index: {}]
  %s2 = inlined_call_operand.vmem [shape: f32[1,384], index: 2, kind: input, shape index: {}]
  %s3 = inlined_call_operand.hbm [shape: f32[2,8,128], index: 3, kind: output, shape index: {}]
  %s4 = sld [smem:[#allocation0]]
  $region53: #{tpu_custom_call.1} parent=0
    _
  %s6 = ssub.s32 1, %s4
  %s7 = scalar_select 0, %s6, %s4
  $region1: #{tpu_custom_call.1} parent=0
    #allocation2 [shape = 'u8[4096]{0}', space=vmem, size = 0x1000, scoped, tag = 'input window, operand 0']
    #allocation3 [shape = 's32[2]{0}', space=sflag, size = 0x8, scoped, tag = 'scoped memory for tpu_custom_call.1']
    #allocation4 [shape = 's32[2]{0}', space=sflag, size = 0x8, scoped, tag = 'scoped memory for tpu_custom_call.1']
    #allocation5 [shape = 'u8[24576]{0}', space=vmem, size = 0x6000, scoped, tag = 'input window, operand 1, single buffered']
    #allocation6 [shape = 's32[1]{0}', space=sflag, size = 0x4, scoped, tag = 'scoped memory for tpu_custom_call.1']
    #allocation7 [shape = 'u8[8192]{0}', space=vmem, size = 0x2000, scoped, tag = 'output window, operand 0']
    %8 = vsyncpa [#allocation3], 0
    %s9 = scalar_lea.sflag [#allocation3], 1
    %10 = vsyncpa %s9, 0
    %11 = vsyncpa [#allocation6], 0
    %12 = vsyncpa [#allocation4], 0
    %s13 = scalar_lea.sflag [#allocation4], 1
    %14 = vsyncpa %s13, 0
    loop: start=0, step=1, limit=4
    $region2: #{tpu_custom_call.1} parent=1 // loop_pre_header
      _
    $region3: #{tpu_custom_call.1} parent=1 // loop_header
      %s16 = sphi 0, %s20
      %p17 = scmp.ge.s32.totalorder %s16, 4
      %s26 = sphi 0, %s28
      %s29 = sphi 0, %s26
      %s30 = sphi 0, %s29
      %s46 = sphi 0, %s30
      %s50 = sphi 0, %s50
      %s52 = sphi 0, %s50
      %s53 = sphi 0, %s52
      %s67 = sphi 0, %s53
      %s71 = sphi 0, %s71
      %s73 = sphi 0, %s71
      %s74 = sphi 0, %s73
      %s88 = sphi 0, %s74
      %s94 = sphi 0, %s96
      %s97 = sphi 0, %s94
      %s98 = sphi 0, %s97
      %s114 = sphi 0, %s98
    $region4: #{tpu_custom_call.1} parent=1 // loop_header_branch
      %19 = sbr.rel (%p17) target = $region8
    $region5: #{tpu_custom_call.1} parent=1 // loop_body
      %s21 = ssub.s32 %s16, 1
      %s22 = ssub.s32 %s16, 2
      %s23 = sadd.s32 %s16, 1
      %s24 = ssub.s32 %s16, %s23
      %p25 = scmp.eq.s32.totalorder %s24, 0
      %s27 = sadd.s32 %s26, 1
      %s28 = scalar_select %p25, %s26, %s27
      %p31 = pneg %p25
      %p32 = scmp.eq.s32.totalorder %s16, 1
      %p33 = por %p31, %p32
      %p34 = scmp.ne.s32.totalorder %s26, %s29
      %p35 = scmp.eq.s32.totalorder %s16, 0
      %p36 = por %p34, %p35
      %p37 = scmp.ne.s32.totalorder %s26, %s29
      %p38 = scmp.eq.s32.totalorder %s21, 1
      %p39 = por %p37, %p38
      %p40 = scmp.ne.s32.totalorder %s29, %s30
      %p41 = scmp.eq.s32.totalorder %s21, 0
      %p42 = por %p40, %p41
      %p43 = scmp.ne.s32.totalorder %s29, %s30
      %p44 = scmp.eq.s32.totalorder %s22, 1
      %p45 = por %p43, %p44
      %p47 = scmp.ne.s32.totalorder %s30, %s46
      %p48 = scmp.eq.s32.totalorder %s22, 0
      %p49 = por %p47, %p48
      %s51 = sadd.s32 %s50, 1
      %p54 = scmp.eq.s32.totalorder %s16, 1
      %p55 = scmp.ne.s32.totalorder %s50, %s52
      %p56 = scmp.eq.s32.totalorder %s16, 0
      %p57 = por %p55, %p56
      %p58 = scmp.ne.s32.totalorder %s50, %s52
      %p59 = scmp.eq.s32.totalorder %s21, 1
      %p60 = por %p58, %p59
      %p61 = scmp.ne.s32.totalorder %s52, %s53
      %p62 = scmp.eq.s32.totalorder %s21, 0
      %p63 = por %p61, %p62
      %p64 = scmp.ne.s32.totalorder %s52, %s53
      %p65 = scmp.eq.s32.totalorder %s22, 1
      %p66 = por %p64, %p65
      %p68 = scmp.ne.s32.totalorder %s53, %s67
      %p69 = scmp.eq.s32.totalorder %s22, 0
      %p70 = por %p68, %p69
      %s72 = sadd.s32 %s71, 1
      %p75 = scmp.eq.s32.totalorder %s16, 1
      %p76 = scmp.ne.s32.totalorder %s71, %s73
      %p77 = scmp.eq.s32.totalorder %s16, 0
      %p78 = por %p76, %p77
      %p79 = scmp.ne.s32.totalorder %s71, %s73
      %p80 = scmp.eq.s32.totalorder %s21, 1
      %p81 = por %p79, %p80
      %p82 = scmp.ne.s32.totalorder %s73, %s74
      %p83 = scmp.eq.s32.totalorder %s21, 0
      %p84 = por %p82, %p83
      %p85 = scmp.ne.s32.totalorder %s73, %s74
      %p86 = scmp.eq.s32.totalorder %s22, 1
      %p87 = por %p85, %p86
      %p89 = scmp.ne.s32.totalorder %s74, %s88
      %p90 = scmp.eq.s32.totalorder %s22, 0
      %p91 = por %p89, %p90
      %s92 = ssub.s32 %s16, %s23
      %p93 = scmp.eq.s32.totalorder %s92, 0
      %s95 = sadd.s32 %s94, 1
      %s96 = scalar_select %p93, %s94, %s95
      %p99 = pneg %p93
      %p100 = scmp.eq.s32.totalorder %s16, 1
      %p101 = por %p99, %p100
      %p102 = scmp.ne.s32.totalorder %s94, %s97
      %p103 = scmp.eq.s32.totalorder %s16, 0
      %p104 = por %p102, %p103
      %p105 = scmp.ne.s32.totalorder %s94, %s97
      %p106 = scmp.eq.s32.totalorder %s21, 1
      %p107 = por %p105, %p106
      %p108 = scmp.ne.s32.totalorder %s97, %s98
      %p109 = scmp.eq.s32.totalorder %s21, 0
      %p110 = por %p108, %p109
      %p111 = scmp.ne.s32.totalorder %s97, %s98
      %p112 = scmp.eq.s32.totalorder %s22, 1
      %p113 = por %p111, %p112
      %p115 = scmp.ne.s32.totalorder %s98, %s114
      %p116 = scmp.eq.s32.totalorder %s22, 0
      %p117 = por %p115, %p116
      %p118 = scmp.le.s32.totalorder 1, %s16
      %p119 = scmp.lt.s32.totalorder %s16, 3
      %p120 = pnand %p118, %p119
      %p121 = pneg %p120
      // Predicated region
      $region9: #{tpu_custom_call.1} parent=5 // pred_check
        _
      $region10: #{tpu_custom_call.1} parent=5 // pred_check_branch
        %123 = sbr.rel (%p120) target = $region12
      $region11: #{tpu_custom_call.1} parent=5 // pred_region
        %s124 = ssub.s32 %s16, 1
        // Predicated region
        $region13: #{tpu_custom_call.1} parent=11 // pred_check
          %p125 = pneg %p63
        $region14: #{tpu_custom_call.1} parent=11 // pred_check_branch
          %127 = sbr.rel (%p125) target = $region16
        $region15: #{tpu_custom_call.1} parent=11 // pred_region
          %s129 = ssub.s32 768, 768
          %130 = vsyncadd [#allocation6], %s129
          %s131 = sshll.u32 [#allocation5], 4
          %s132 = int_to_ptr.vmem [resolvable:$true] %s131
          %137 = dma.hbm_to_vmem [thread:$0]  %s1, 768, %s132, [#allocation6], 192, 192, 12
        $region16: #{tpu_custom_call.1} parent=11 // pred_fallthru
          _
        // Predicated region
        $region17: #{tpu_custom_call.1} parent=11 // pred_check
          %p138 = pneg %p84
        $region18: #{tpu_custom_call.1} parent=11 // pred_check_branch
          %140 = sbr.rel (%p138) target = $region20
        $region19: #{tpu_custom_call.1} parent=11 // pred_region
          _
        $region20: #{tpu_custom_call.1} parent=11 // pred_fallthru
          _
      $region12: #{tpu_custom_call.1} parent=5 // pred_fallthru
        _
      %p141 = scmp.lt.s32.totalorder %s16, 2
      // Predicated region
      $region21: #{tpu_custom_call.1} parent=5 // pred_check
        %p142 = pneg %p141
      $region22: #{tpu_custom_call.1} parent=5 // pred_check_branch
        %144 = sbr.rel (%p142) target = $region24
      $region23: #{tpu_custom_call.1} parent=5 // pred_region
        // Predicated region
        $region25: #{tpu_custom_call.1} parent=23 // pred_check
          %p145 = pneg %p36
        $region26: #{tpu_custom_call.1} parent=23 // pred_check_branch
          %147 = sbr.rel (%p145) target = $region28
        $region27: #{tpu_custom_call.1} parent=23 // pred_region
          %s148 = sand.u32 %s26, 1
          %s149 = scalar_lea.sflag [#allocation3], %s148
          %s150 = sand.u32 %s26, 1
          %s151 = smul.addr %s150, 4
          %s152 = scalar_lea.vmem [#allocation2], %s151
          %s154 = ssub.s32 64, 64
          %155 = vsyncadd %s149, %s154
          %s156 = smul.addr %s16, 64
          %s157 = scalar_lea.hbm %s0, %s156
          %s159 = sshll.u32 %s152, 4
          %s160 = int_to_ptr.vmem [resolvable:$true] %s159
          %162 = dma.hbm_to_vmem [thread:$0]  %s157, 64, %s160, %s149
        $region28: #{tpu_custom_call.1} parent=23 // pred_fallthru
          _
      $region24: #{tpu_custom_call.1} parent=5 // pred_fallthru
        _
      %p163 = scmp.le.s32.totalorder 1, %s16
      %p164 = scmp.lt.s32.totalorder %s16, 3
      %p165 = pnand %p163, %p164
      %p166 = pneg %p165
      // Predicated region
      $region29: #{tpu_custom_call.1} parent=5 // pred_check
        _
      $region30: #{tpu_custom_call.1} parent=5 // pred_check_branch
        %168 = sbr.rel (%p165) target = $region32
      $region31: #{tpu_custom_call.1} parent=5 // pred_region
        %s169 = ssub.s32 %s16, 1
        %s170 = sand.u32 %s29, 1
        %s171 = scalar_lea.sflag [#allocation3], %s170
        %s172 = sand.u32 %s29, 1
        %s173 = smul.addr %s172, 4
        %s174 = scalar_lea.vmem [#allocation2], %s173
        // Predicated region
        $region33: #{tpu_custom_call.1} parent=31 // pred_check
          %p175 = pneg %p42
        $region34: #{tpu_custom_call.1} parent=31 // pred_check_branch
          %177 = sbr.rel (%p175) target = $region36
        $region35: #{tpu_custom_call.1} parent=31 // pred_region
          %178 = dma.done %s171, 64
        $region36: #{tpu_custom_call.1} parent=31 // pred_fallthru
          _
        // Predicated region
        $region37: #{tpu_custom_call.1} parent=31 // pred_check
          %p179 = pneg %p63
        $region38: #{tpu_custom_call.1} parent=31 // pred_check_branch
          %181 = sbr.rel (%p179) target = $region40
        $region39: #{tpu_custom_call.1} parent=31 // pred_region
          %182 = dma.done [#allocation6], 768
        $region40: #{tpu_custom_call.1} parent=31 // pred_fallthru
          _
        %s183 = sand.u32 %s29, 1
        %s184 = scalar_lea.sflag [#allocation3], %s183
        %s185 = sand.u32 %s29, 1
        %s186 = smul.addr %s185, 4
        %s187 = scalar_lea.vmem [#allocation2], %s186
        %p188 = pneg %p42
        %p189 = pneg %p39
        %p190 = pneg %p63
        %p191 = pneg %p60
        %p192 = pneg %p84
        %p193 = pneg %p81
        %p194 = pneg %p110
        %p195 = pneg %p107
        %s196 = sand.u32 %s97, 1
        %s197 = scalar_lea.sflag [#allocation4], %s196
        %s198 = sand.u32 %s97, 1
        %s199 = smul.addr %s198, 8
        %s200 = scalar_lea.vmem [#allocation7], %s199
        %v202 = vld [vmem:[%s174] sm:$0xf]
        %v203 = vld [vmem:[#allocation5] sm:$0xff]
        %v204 = vld [vmem:[#allocation5 + $0x8] sm:$0xf]
        %v205 = vld [vmem:[#allocation5 + $0xc] sm:$0xff]
        %v206 = vld [vmem:[#allocation5 + $0x14] sm:$0xf]
        %v207 = vld [vmem:[#allocation5 + $0x18] sm:$0xff]
        %v208 = vld [vmem:[#allocation5 + $0x20] sm:$0xf]
        %v209 = vld [vmem:[#allocation5 + $0x24] sm:$0xff]
        %v210 = vld [vmem:[#allocation5 + $0x2c] sm:$0xf]
        %v211 = vld [vmem:[%s2] sm:$0x7]
        %v213 = vlaneseq
        %v214 = vshrl.u32 %v213, 7
        %v215 = vsub.s32 0, %v214
        %v216 = vrot.slane %v211, %v215
        %v217 = vlaneseq
        %v218 = vshrl.u32 %v217, 7
        %v219 = vsub.s32 1, %v218
        %v220 = vrot.slane %v211, %v219
        %v221 = vlaneseq
        %v222 = vshrl.u32 %v221, 7
        %v223 = vsub.s32 2, %v222
        %v224 = vrot.slane %v211, %v223
        %v236 = vunpack.c.l.b16 %v203
        %v237 = vunpack.c.h.b16 %v203
        %v238 = vunpack.c.l.b16 %v204
        %v239 = vunpack.c.l.b16 %v205
        %v240 = vunpack.c.h.b16 %v205
        %v241 = vunpack.c.l.b16 %v206
        %v242 = vunpack.c.l.b16 %v207
        %v243 = vunpack.c.h.b16 %v207
        %v244 = vunpack.c.l.b16 %v208
        %v245 = vunpack.c.l.b16 %v209
        %v246 = vunpack.c.h.b16 %v209
        %v247 = vunpack.c.l.b16 %v210
        %v248 = vpack.c.b16 %v239, %v236
        %v249 = vpack.c.b16 %v240, %v237
        %v250 = vpack.c.b16 %v241, %v238
        %v251 = vpack.c.b16 %v245, %v242
        %v252 = vpack.c.b16 %v246, %v243
        %v253 = vpack.c.b16 %v247, %v244
        %vm260 = vcmask 261120
        %v262 = vsel %vm260, %v202, 0
        %264 = vmatprep.subr.bf16.mxu0 %v249
        %265 = vmatpush1.bf16.msra.mxu0 %v248
        %266 = vmatprep.subr.bf16.mxu0 %v252
        %267 = vmatpush1.bf16.msra.mxu0 %v251
        %268 = vmatprep.subr.bf16.mxu0 0
        %269 = vmatpush1.bf16.msra.mxu0 0
        %270 = vmatprep.subr.bf16.mxu0 0
        %271 = vmatpush1.bf16.msra.mxu0 0
        %272 = vmatprep.subr.bf16.mxu0 0
        %273 = vmatpush1.bf16.msra.mxu0 0
        %274 = vmatprep.subr.bf16.mxu0 0
        %275 = vmatpush1.bf16.msra.mxu0 0
        %276 = vmatprep.subr.bf16.mxu0 0
        %277 = vmatpush1.bf16.msra.mxu0 0
        %278 = vmatprep.subr.bf16.mxu0 0
        %279 = vmatpush1.bf16.msra.mxu0 0
        %280 = vmatprep.subr.bf16.mxu0 0
        %281 = vmatpush1.bf16.msra.mxu0 0
        %282 = vmatprep.subr.bf16.mxu0 0
        %283 = vmatpush1.bf16.msra.mxu0 0
        %284 = vmatprep.subr.bf16.mxu0 0
        %285 = vmatpush1.bf16.msra.mxu0 0
        %286 = vmatprep.subr.bf16.mxu0 0
        %287 = vmatpush1.bf16.msra.mxu0 0
        %288 = vmatprep.subr.bf16.mxu0 0
        %289 = vmatpush1.bf16.msra.mxu0 0
        %290 = vmatprep.subr.bf16.mxu0 0
        %291 = vmatpush1.bf16.msra.mxu0 0
        %292 = vmatprep.subr.bf16.mxu0 0
        %293 = vmatpush1.bf16.msra.mxu0 0
        %294 = vmatprep.subr.bf16.mxu0 0
        %295 = vmatpush1.bf16.msra.mxu0 0
        %296 = vmatprep.mubr.bf16.mxu0 0
        %297 = vmatmul.mubr.bf16.gmra.mrb[0].mxu0 %v262
        %v298 = vpop.f32.mrb[0].mxu0
        %v299 = vadd.f32 %v216, %v298
        %v300 = vpop.f32.mrb[0].mxu0
        %v301 = vadd.f32 %v220, %v300
        %v302 = vpop.f32.mrb[0].mxu0
        %v303 = vpop.f32.mrb[0].mxu0
        %304 = vdwg.mxu0
        %305 = vmatprep.subr.bf16.mxu0 0
        %306 = vmatpush1.bf16.msra.mxu0 %v250
        %307 = vmatprep.subr.bf16.mxu0 0
        %308 = vmatpush1.bf16.msra.mxu0 %v253
        %309 = vmatprep.subr.bf16.mxu0 0
        %310 = vmatpush1.bf16.msra.mxu0 0
        %311 = vmatprep.subr.bf16.mxu0 0
        %312 = vmatpush1.bf16.msra.mxu0 0
        %313 = vmatprep.subr.bf16.mxu0 0
        %314 = vmatpush1.bf16.msra.mxu0 0
        %315 = vmatprep.subr.bf16.mxu0 0
        %316 = vmatpush1.bf16.msra.mxu0 0
        %317 = vmatprep.subr.bf16.mxu0 0
        %318 = vmatpush1.bf16.msra.mxu0 0
        %319 = vmatprep.subr.bf16.mxu0 0
        %320 = vmatpush1.bf16.msra.mxu0 0
        %321 = vmatprep.subr.bf16.mxu0 0
        %322 = vmatpush1.bf16.msra.mxu0 0
        %323 = vmatprep.subr.bf16.mxu0 0
        %324 = vmatpush1.bf16.msra.mxu0 0
        %325 = vmatprep.subr.bf16.mxu0 0
        %326 = vmatpush1.bf16.msra.mxu0 0
        %327 = vmatprep.subr.bf16.mxu0 0
        %328 = vmatpush1.bf16.msra.mxu0 0
        %329 = vmatprep.subr.bf16.mxu0 0
        %330 = vmatpush1.bf16.msra.mxu0 0
        %331 = vmatprep.subr.bf16.mxu0 0
        %332 = vmatpush1.bf16.msra.mxu0 0
        %333 = vmatprep.subr.bf16.mxu0 0
        %334 = vmatpush1.bf16.msra.mxu0 0
        %335 = vmatprep.subr.bf16.mxu0 0
        %336 = vmatpush1.bf16.msra.mxu0 0
        %337 = vmatprep.mubr.bf16.mxu0 0
        %338 = vmatmul.mubr.bf16.gmra.mrb[0].mxu0 %v262
        %v339 = vpop.f32.mrb[0].mxu0
        %v340 = vadd.f32 %v224, %v339
        %v341 = vpop.f32.mrb[0].mxu0
        %v342 = vpop.f32.mrb[0].mxu0
        %v343 = vpop.f32.mrb[0].mxu0
        %344 = vdwg.mxu0
        %v345 = vmul.f32 %v299, 0.25
        %346 = vmatprep.subr.mxu0 0.0
        %347 = vmatpush1.xpose.msra.mxu0 %v301
        %348 = vmatprep.subr.mxu0 0.0
        %349 = vmatpush1.xpose.msra.mxu0 0.0
        %350 = vmatprep.subr.mxu0 0.0
        %351 = vmatpush1.xpose.msra.mxu0 0.0
        %352 = vmatprep.subr.mxu0 0.0
        %353 = vmatpush1.xpose.msra.mxu0 0.0
        %354 = vmatprep.subr.mxu0 0.0
        %355 = vmatpush1.xpose.msra.mxu0 0.0
        %356 = vmatprep.subr.mxu0 0.0
        %357 = vmatpush1.xpose.msra.mxu0 0.0
        %358 = vmatprep.subr.mxu0 0.0
        %359 = vmatpush1.xpose.msra.mxu0 0.0
        %360 = vmatprep.subr.mxu0 0.0
        %361 = vmatpush1.xpose.msra.mxu0 0.0
        %362 = vmatprep.subr.mxu0 0.0
        %363 = vmatpush1.xpose.msra.mxu0 0.0
        %364 = vmatprep.subr.mxu0 0.0
        %365 = vmatpush1.xpose.msra.mxu0 0.0
        %366 = vmatprep.subr.mxu0 0.0
        %367 = vmatpush1.xpose.msra.mxu0 0.0
        %368 = vmatprep.subr.mxu0 0.0
        %369 = vmatpush1.xpose.msra.mxu0 0.0
        %370 = vmatprep.subr.mxu0 0.0
        %371 = vmatpush1.xpose.msra.mxu0 0.0
        %372 = vmatprep.subr.mxu0 0.0
        %373 = vmatpush1.xpose.msra.mxu0 0.0
        %374 = vmatprep.subr.mxu0 0.0
        %375 = vmatpush1.xpose.msra.mxu0 0.0
        %376 = vmatprep.subr.mxu0 0.0
        %377 = vmatpush1.xpose.msra.mxu0 0.0
        %378 = vmatprep.subr.mxu0 0.0
        %379 = vmatpush1.xpose.msra.mxu0 0.0
        %380 = vmatprep.subr.mxu0 0.0
        %381 = vmatpush1.xpose.msra.mxu0 0.0
        %382 = vmatprep.subr.mxu0 0.0
        %383 = vmatpush1.xpose.msra.mxu0 0.0
        %384 = vmatprep.subr.mxu0 0.0
        %385 = vmatpush1.xpose.msra.mxu0 0.0
        %386 = vmatprep.subr.mxu0 0.0
        %387 = vmatpush1.xpose.msra.mxu0 0.0
        %388 = vmatprep.subr.mxu0 0.0
        %389 = vmatpush1.xpose.msra.mxu0 0.0
        %390 = vmatprep.subr.mxu0 0.0
        %391 = vmatpush1.xpose.msra.mxu0 0.0
        %392 = vmatprep.subr.mxu0 0.0
        %393 = vmatpush1.xpose.msra.mxu0 0.0
        %394 = vmatprep.subr.mxu0 0.0
        %395 = vmatpush1.xpose.msra.mxu0 0.0
        %396 = vmatprep.subr.mxu0 0.0
        %397 = vmatpush1.xpose.msra.mxu0 0.0
        %398 = vmatprep.subr.mxu0 0.0
        %399 = vmatpush1.xpose.msra.mxu0 0.0
        %400 = vmatprep.subr.mxu0 0.0
        %401 = vmatpush1.xpose.msra.mxu0 0.0
        %402 = vmatprep.subr.mxu0 0.0
        %403 = vmatpush1.xpose.msra.mxu0 0.0
        %404 = vmatprep.subr.mxu0 0.0
        %405 = vmatpush1.xpose.msra.mxu0 0.0
        %406 = vmatprep.subr.mxu0 0.0
        %407 = vmatpush1.xpose.msra.mxu0 0.0
        %408 = vmatprep.subr.mxu0 0.0
        %409 = vmatpush1.xpose.msra.mxu0 0.0
        %410 = vmatprep.mubr.f32.mxu0 0.0
        %411 = vmatmul.mubr.f32.gmra.mrb[0].mxu0 %v345
        %v412 = vpop.f32.mrb[0].mxu0
        %v413 = vadd.f32 0.0, %v412
        %v414 = vpop.f32.mrb[0].mxu0
        %415 = vdwg.mxu0
        %v416 = vlaneseq
        %v417 = vshrl.u32 %v416, 7
        %v418 = vlaneseq
        %v419 = vand.u32 %v418, 127
        %vm420 = vcmp.le.s32.totalorder %v419, %v417
        %v421 = vsel %vm420, %v413, -inf
        %vm422 = vcmask 64512
        %v423 = vsel %vm422, %v421, -inf
        %424 = vmax.xlane.f32.xlu0 %v423
        %v425 = vpop.xlane.xlu0 %424
        %v426 = vsub.f32 %v421, %v425
        %v427 = vmul.f32 %v426, 1.442695
        %v428 = vpow.pop %v427
        %v429 = vsel %vm422, %v428, 0.0
        %430 = vadd.xlane.f32.xlu0 %v429
        %v431 = vpop.xlane.xlu0 %430
        %v432 = vrcp.pop %v431
        %v433 = vmul.f32 %v428, %v432
        %v434 = vpack.c.bf16 %v433, %v433
        %v435 = vpack.c.bf16 %v340, %v340
        %v437 = vsel %vm422, %v434, 0
        %vm439 = vcmask 1043456
        %v441 = vsel %vm439, %v435, 0
        %443 = vmatprep.subr.bf16.mxu0 0
        %444 = vmatpush1.bf16.msra.mxu0 %v441
        %445 = vmatprep.subr.bf16.mxu0 0
        %446 = vmatpush1.bf16.msra.mxu0 0
        %447 = vmatprep.subr.bf16.mxu0 0
        %448 = vmatpush1.bf16.msra.mxu0 0
        %449 = vmatprep.subr.bf16.mxu0 0
        %450 = vmatpush1.bf16.msra.mxu0 0
        %451 = vmatprep.subr.bf16.mxu0 0
        %452 = vmatpush1.bf16.msra.mxu0 0
        %453 = vmatprep.subr.bf16.mxu0 0
        %454 = vmatpush1.bf16.msra.mxu0 0
        %455 = vmatprep.subr.bf16.mxu0 0
        %456 = vmatpush1.bf16.msra.mxu0 0
        %457 = vmatprep.subr.bf16.mxu0 0
        %458 = vmatpush1.bf16.msra.mxu0 0
        %459 = vmatprep.subr.bf16.mxu0 0
        %460 = vmatpush1.bf16.msra.mxu0 0
        %461 = vmatprep.subr.bf16.mxu0 0
        %462 = vmatpush1.bf16.msra.mxu0 0
        %463 = vmatprep.subr.bf16.mxu0 0
        %464 = vmatpush1.bf16.msra.mxu0 0
        %465 = vmatprep.subr.bf16.mxu0 0
        %466 = vmatpush1.bf16.msra.mxu0 0
        %467 = vmatprep.subr.bf16.mxu0 0
        %468 = vmatpush1.bf16.msra.mxu0 0
        %469 = vmatprep.subr.bf16.mxu0 0
        %470 = vmatpush1.bf16.msra.mxu0 0
        %471 = vmatprep.subr.bf16.mxu0 0
        %472 = vmatpush1.bf16.msra.mxu0 0
        %473 = vmatprep.subr.bf16.mxu0 0
        %474 = vmatpush1.bf16.msra.mxu0 0
        %475 = vmatprep.mubr.bf16.mxu0 0
        %476 = vmatmul.mubr.bf16.gmra.mrb[0].mxu0 %v437
        %v477 = vpop.f32.mrb[0].mxu0
        %v478 = vadd.f32 0.0, %v477
        %v479 = vpop.f32.mrb[0].mxu0
        %v480 = vpop.f32.mrb[0].mxu0
        %v481 = vpop.f32.mrb[0].mxu0
        %482 = vdwg.mxu0
        %483 = vst [vmem:[%s200] sm:$0xff] %v478
        %s484 = sand.u32 %s97, 1
        %s485 = scalar_lea.sflag [#allocation4], %s484
        %s486 = sand.u32 %s97, 1
        %s487 = smul.addr %s486, 8
        %s488 = scalar_lea.vmem [#allocation7], %s487
        // Predicated region
        $region41: #{tpu_custom_call.1} parent=31 // pred_check
          %p489 = pneg %p107
        $region42: #{tpu_custom_call.1} parent=31 // pred_check_branch
          %491 = sbr.rel (%p489) target = $region44
        $region43: #{tpu_custom_call.1} parent=31 // pred_region
          %s493 = ssub.s32 128, 128
          %494 = vsyncadd %s485, %s493
          %s495 = smul.addr %s21, 128
          %s496 = scalar_lea.hbm %s3, %s495
          %s498 = sshll.u32 %s488, 4
          %s499 = int_to_ptr.vmem [resolvable:$true] %s498
          %501 = dma.vmem_to_hbm [thread:$0]  %s499, 128, %s496, %s485
        $region44: #{tpu_custom_call.1} parent=31 // pred_fallthru
          _
      $region32: #{tpu_custom_call.1} parent=5 // pred_fallthru
        _
      %p502 = scmp.le.s32.totalorder 2, %s16
      // Predicated region
      $region45: #{tpu_custom_call.1} parent=5 // pred_check
        %p503 = pneg %p502
      $region46: #{tpu_custom_call.1} parent=5 // pred_check_branch
        %505 = sbr.rel (%p503) target = $region48
      $region47: #{tpu_custom_call.1} parent=5 // pred_region
        %s506 = ssub.s32 %s16, 2
        // Predicated region
        $region49: #{tpu_custom_call.1} parent=47 // pred_check
          %p507 = pneg %p113
        $region50: #{tpu_custom_call.1} parent=47 // pred_check_branch
          %509 = sbr.rel (%p507) target = $region52
        $region51: #{tpu_custom_call.1} parent=47 // pred_region
          %s510 = sand.u32 %s98, 1
          %s511 = scalar_lea.sflag [#allocation4], %s510
          %s512 = sand.u32 %s98, 1
          %s513 = smul.addr %s512, 8
          %s514 = scalar_lea.vmem [#allocation7], %s513
          %515 = dma.done %s511, 128
        $region52: #{tpu_custom_call.1} parent=47 // pred_fallthru
          _
      $region48: #{tpu_custom_call.1} parent=5 // pred_fallthru
        _
    $region6: #{tpu_custom_call.1} parent=1 // loop_footer
      %s20 = sadd.s32 1, %s16
    $region7: #{tpu_custom_call.1} parent=1 // loop_footer_branch
      %15 = sbr.rel target = $region3
    $region8: #{tpu_custom_call.1} parent=1 // loop_exit
      _
    %516 = vsyncpa [#allocation3], 1
    %s517 = scalar_lea.sflag [#allocation3], 1
    %518 = vsyncpa %s517, 1
    %519 = vsyncpa [#allocation6], 1
    %520 = vsyncpa [#allocation4], 1
    %s521 = scalar_lea.sflag [#allocation4], 1
    %522 = vsyncpa %s521, 1

</llo_original>
